<compile_context>
chip_gen: v5e
topology: v5e:2x2
jax: 0.10.0
libtpu: 0.0.40
codegen_flags: <defaults>
</compile_context>

<pallas_src>
import jax
import jax.numpy as jnp
from jax.experimental import pallas as pl
from jax.experimental.pallas import tpu as pltpu

LANE = 128  # TPU lane width


def _linear_kernel(x_ref, w_ref, b_ref, o_ref):
    # x_ref: (tm, C), w_ref: (C, Np), b_ref: (1, Np), o_ref: (tm, Np)
    x = x_ref[...]
    w = w_ref[...]
    if x.dtype != w.dtype:
        # bf16 compute path: feed the MXU the weight's (possibly bf16) dtype,
        # accumulate in f32 via preferred_element_type, add f32 bias.
        x = x.astype(w.dtype)
    acc = jnp.dot(x, w, preferred_element_type=jnp.float32)
    o_ref[...] = (acc + b_ref[...]).astype(o_ref.dtype)


def prepare_params(weight: jax.Array, bias: jax.Array,
                   compute_dtype=None):
    """One-time parameter preparation (do this at init, NOT per call).

    weight: (num_subClasses, concept_dim) in PyTorch layout.
    bias:   (num_subClasses,).
    Returns (w_padded (C, Np), b_padded (1, Np)) with Np = ceil(N/128)*128.
    """
    N, C = weight.shape
    Np = ((N + LANE - 1) // LANE) * LANE
    w_dtype = compute_dtype if compute_dtype is not None else weight.dtype
    w_t = weight.T.astype(w_dtype)                      # (C, N), done once
    w_pad = jnp.zeros((C, Np), dtype=w_dtype).at[:, :N].set(w_t)
    b_pad = jnp.zeros((1, Np), dtype=jnp.float32).at[0, :N].set(
        bias.astype(jnp.float32))
    return w_pad, b_pad


def sub_label_predictor(concept_logits: jax.Array,
                        w_padded: jax.Array,
                        b_padded: jax.Array,
                        num_subClasses: int,
                        *,
                        block_m: int = 512) -> jax.Array:
    """concept_logits: (B, concept_dim); w_padded/b_padded from prepare_params.
    Returns (B, num_subClasses)."""
    B, C = concept_logits.shape
    Cw, Np = w_padded.shape
    assert C == Cw, f"concept_dim mismatch: {C} vs {Cw}"
    assert b_padded.shape == (1, Np)

    # Batch tile: full B if small (block == full dim is always legal),
    # otherwise a multiple-of-8 tile that amortizes per-step grid overhead.
    tm = B if B <= block_m else block_m
    grid_m = pl.cdiv(B, tm)

    out_padded = pl.pallas_call(
        _linear_kernel,
        out_shape=jax.ShapeDtypeStruct((B, Np), concept_logits.dtype),
        grid=(grid_m,),
        in_specs=[
            pl.BlockSpec((tm, C), lambda i: (i, 0)),     # x: tiled over batch
            pl.BlockSpec((Cw, Np), lambda i: (0, 0)),    # W: resident in VMEM
            pl.BlockSpec((1, Np), lambda i: (0, 0)),     # b: resident in VMEM
        ],
        out_specs=pl.BlockSpec((tm, Np), lambda i: (i, 0)),
        compiler_params=pltpu.CompilerParams(
            dimension_semantics=("parallel",)),          # v7x: 2 TCs on batch
    )(concept_logits, w_padded, b_padded)

    # Drop the lane padding (cheap; typically fused into the consumer).
    return out_padded[:, :num_subClasses]


def init_params(key, concept_dim: int = 96, num_subClasses: int = 19):
    """Matches nn.init.trunc_normal_(std=0.02) (truncation at absolute ±2,
    i.e. ±100σ — effectively un-truncated) and zeros for bias."""
    std = 0.02
    w = std * jax.random.truncated_normal(
        key, -2.0 / std, 2.0 / std, (num_subClasses, concept_dim),
        dtype=jnp.float32)
    b = jnp.zeros((num_subClasses,), dtype=jnp.float32)
    return w, b


if __name__ == "__main__":
    key = jax.random.PRNGKey(0)
    k_w, k_x, k_x2 = jax.random.split(key, 3)

    concept_dim, num_subClasses = 96, 19
    weight, bias = init_params(k_w, concept_dim, num_subClasses)

    # One-time prep (pre-transpose + lane-pad); f32 for exact parity.
    w_pad, b_pad = prepare_params(weight, bias)

    # --- small-batch case (module-typical size) ---
    batch = 8
    x = jax.random.normal(k_x, (batch, concept_dim), dtype=jnp.float32)
    out = jax.block_until_ready(
        sub_label_predictor(x, w_pad, b_pad, num_subClasses))
    ref = x @ weight.T + bias
    assert out.shape == (batch, num_subClasses)
    assert jnp.allclose(out, ref, atol=1e-5, rtol=1e-5)

    # --- larger batch to exercise the tiled / pipelined path (ragged edge) ---
    batch2 = 600
    x2 = jax.random.normal(k_x2, (batch2, concept_dim), dtype=jnp.float32)
    out2 = jax.block_until_ready(
        sub_label_predictor(x2, w_pad, b_pad, num_subClasses, block_m=256))
    ref2 = x2 @ weight.T + bias
    assert out2.shape == (batch2, num_subClasses)
    assert jnp.allclose(out2, ref2, atol=1e-4, rtol=1e-4)

    print("KERNEL_OK")
</pallas_src>

<mosaic_0001>
module attributes {stable_mosaic.version = 11 : i64} {
  func.func @_linear_kernel(%arg0: i32, %arg1: memref<8x96xf32, #tpu.memory_space<vmem>>, %arg2: memref<96x128xf32, #tpu.memory_space<vmem>>, %arg3: memref<1x128xf32, #tpu.memory_space<vmem>>, %arg4: memref<8x128xf32, #tpu.memory_space<vmem>>) attributes {dimension_semantics = [#tpu.dimension_semantics<parallel>], iteration_bounds = array<i64: 1>, scalar_prefetch = 0 : i64, scratch_operands = 0 : i64, tpu.core_type = #tpu.core_type<tc>, window_params = [{transform_indices = @transform_0, window_bounds = array<i64: 8, 96>}, {pipeline_mode = #tpu.pipeline_mode<synchronous>, transform_indices = @transform_1, window_bounds = array<i64: 96, 128>}, {pipeline_mode = #tpu.pipeline_mode<synchronous>, transform_indices = @transform_2, window_bounds = array<i64: 1, 128>}, {transform_indices = @transform_3, window_bounds = array<i64: 8, 128>}]} {
    %c0 = arith.constant 0 : index
    %c0_0 = arith.constant 0 : index
    %0 = vector.load %arg1[%c0, %c0_0] : memref<8x96xf32, #tpu.memory_space<vmem>>, vector<8x96xf32>
    %c0_1 = arith.constant 0 : index
    %c0_2 = arith.constant 0 : index
    %1 = vector.load %arg2[%c0_1, %c0_2] : memref<96x128xf32, #tpu.memory_space<vmem>>, vector<96x128xf32>
    %cst = arith.constant dense<0.000000e+00> : vector<8x128xf32>
    %2 = tpu.matmul %0, %1, %cst {dimension_numbers = #tpu.dot_dimension_numbers<[1], [0], [0], [1], [0, 0, 1, 1], [], []>} : vector<8x96xf32>, vector<96x128xf32>, vector<8x128xf32> -> vector<8x128xf32>
    %c0_3 = arith.constant 0 : index
    %c0_4 = arith.constant 0 : index
    %3 = vector.load %arg3[%c0_3, %c0_4] : memref<1x128xf32, #tpu.memory_space<vmem>>, vector<1x128xf32>
    %4 = vector.broadcast %3 : vector<1x128xf32> to vector<8x128xf32>
    %5 = arith.addf %2, %4 : vector<8x128xf32>
    %c0_5 = arith.constant 0 : index
    %c0_6 = arith.constant 0 : index
    %6 = vector.load %arg4[%c0_5, %c0_6] : memref<8x128xf32, #tpu.memory_space<vmem>>, vector<8x128xf32>
    tpu.vector_store %arg4[%c0_5, %c0_6], %5 {strides = array<i32>} : memref<8x128xf32, #tpu.memory_space<vmem>>, vector<8x128xf32>,
    return
  }
  func.func @transform_0(%arg0: i32) -> (i32, i32) {
    %c0_i32 = arith.constant 0 : i32
    %c0_i32_0 = arith.constant 0 : i32
    return %arg0, %c0_i32 : i32, i32
  }
  func.func @transform_1(%arg0: i32) -> (i32, i32) {
    %c0_i32 = arith.constant 0 : i32
    %c0_i32_0 = arith.constant 0 : i32
    %c0_i32_1 = arith.constant 0 : i32
    return %c0_i32, %c0_i32_0 : i32, i32
  }
  func.func @transform_2(%arg0: i32) -> (i32, i32) {
    %c0_i32 = arith.constant 0 : i32
    %c0_i32_0 = arith.constant 0 : i32
    %c0_i32_1 = arith.constant 0 : i32
    return %c0_i32, %c0_i32_0 : i32, i32
  }
  func.func @transform_3(%arg0: i32) -> (i32, i32) {
    %c0_i32 = arith.constant 0 : i32
    %c0_i32_0 = arith.constant 0 : i32
    return %arg0, %c0_i32 : i32, i32
  }
}

</mosaic_0001>

<llo_original>
// kernel: tpu_custom_call.1
$region0: #{tpu_custom_call.1}
  #allocation0 [shape = 'u32[]', space=smem, size = 0x4, offset = 0x4, fixed_abs, tag = 'smem constant byte address 0x4 - core index']
  #allocation1 [shape = 'u32[72,128]{1,0:T(1,128)}', space=vmem, size = 0x9000, scoped, tag = 'internal scratch']
  %s0 = inlined_call_operand.hbm [shape: f32[8,96], index: 0, kind: input, shape index: {}]
  %s1 = inlined_call_operand.hbm [shape: f32[96,128], index: 1, kind: input, shape index: {}]
  %s2 = inlined_call_operand.vmem [shape: f32[1,128], index: 2, kind: input, shape index: {}]
  %s3 = inlined_call_operand.hbm [shape: f32[8,128], index: 3, kind: output, shape index: {}]
  %s4 = sld [smem:[#allocation0]]
  $region30: #{tpu_custom_call.1} parent=0
    _
  %s6 = ssub.s32 1, %s4
  %s7 = scalar_select 0, %s6, %s4
  $region1: #{tpu_custom_call.1} parent=0
    #allocation2 [shape = 'u8[4096]{0}', space=vmem, size = 0x1000, scoped, tag = 'input window, operand 0, single buffered']
    #allocation3 [shape = 's32[1]{0}', space=sflag, size = 0x4, scoped, tag = 'scoped memory for tpu_custom_call.1']
    #allocation4 [shape = 's32[1]{0}', space=sflag, size = 0x4, scoped, tag = 'scoped memory for tpu_custom_call.1']
    #allocation5 [shape = 'u8[49152]{0}', space=vmem, size = 0xc000, scoped, tag = 'input window, operand 1, single buffered']
    #allocation6 [shape = 's32[1]{0}', space=sflag, size = 0x4, scoped, tag = 'scoped memory for tpu_custom_call.1']
    #allocation7 [shape = 'u8[4096]{0}', space=vmem, size = 0x1000, scoped, tag = 'output window, operand 0, single buffered']
    %8 = vsyncpa [#allocation3], 0
    %9 = vsyncpa [#allocation6], 0
    %10 = vsyncpa [#allocation4], 0
    // Predicated region
    $region2: #{tpu_custom_call.1} parent=1 // pred_check
      _
    $region3: #{tpu_custom_call.1} parent=1 // pred_check_branch
      %12 = sbr.rel (0) target = $region5
    $region4: #{tpu_custom_call.1} parent=1 // pred_region
      %14 = vsyncadd [#allocation3], 0
      %s16 = sshll.u32 %s0, 4
      %s17 = int_to_ptr.hbm [resolvable:$true] %s16
      %s18 = sshll.u32 [#allocation2], 4
      %s19 = int_to_ptr.vmem [resolvable:$true] %s18
      %21 = dma.hbm_to_vmem [thread:$0]  %s17, 128, %s19, [#allocation3]
    $region5: #{tpu_custom_call.1} parent=1 // pred_fallthru
      _
    // Predicated region
    $region6: #{tpu_custom_call.1} parent=1 // pred_check
      _
    $region7: #{tpu_custom_call.1} parent=1 // pred_check_branch
      %23 = sbr.rel (0) target = $region9
    $region8: #{tpu_custom_call.1} parent=1 // pred_region
      %25 = vsyncadd [#allocation6], 0
      %s26 = sshll.u32 %s1, 4
      %s27 = int_to_ptr.hbm [resolvable:$true] %s26
      %s28 = sshll.u32 [#allocation5], 4
      %s29 = int_to_ptr.vmem [resolvable:$true] %s28
      %34 = dma.hbm_to_vmem [thread:$0]  %s27, 1536, %s29, [#allocation6], 128, 128, 8
    $region9: #{tpu_custom_call.1} parent=1 // pred_fallthru
      _
    // Predicated region
    $region10: #{tpu_custom_call.1} parent=1 // pred_check
      _
    $region11: #{tpu_custom_call.1} parent=1 // pred_check_branch
      %36 = sbr.rel (0) target = $region13
    $region12: #{tpu_custom_call.1} parent=1 // pred_region
      _
    $region13: #{tpu_custom_call.1} parent=1 // pred_fallthru
      _
    // Predicated region
    $region14: #{tpu_custom_call.1} parent=1 // pred_check
      _
    $region15: #{tpu_custom_call.1} parent=1 // pred_check_branch
      %38 = sbr.rel (0) target = $region17
    $region16: #{tpu_custom_call.1} parent=1 // pred_region
      %40 = dma.done [#allocation3], 128
    $region17: #{tpu_custom_call.1} parent=1 // pred_fallthru
      _
    // Predicated region
    $region18: #{tpu_custom_call.1} parent=1 // pred_check
      _
    $region19: #{tpu_custom_call.1} parent=1 // pred_check_branch
      %42 = sbr.rel (0) target = $region21
    $region20: #{tpu_custom_call.1} parent=1 // pred_region
      %44 = dma.done [#allocation6], 1536
    $region21: #{tpu_custom_call.1} parent=1 // pred_fallthru
      _
    %v45 = vld [vmem:[#allocation2] sm:$0xff]
    %v46 = vld [vmem:[#allocation5] sm:$0xff]
    %v47 = vld [vmem:[#allocation5 + $0x8] sm:$0xff]
    %v48 = vld [vmem:[#allocation5 + $0x10] sm:$0xff]
    %v49 = vld [vmem:[#allocation5 + $0x18] sm:$0xff]
    %v50 = vld [vmem:[#allocation5 + $0x20] sm:$0xff]
    %v51 = vld [vmem:[#allocation5 + $0x28] sm:$0xff]
    %v52 = vld [vmem:[#allocation5 + $0x30] sm:$0xff]
    %v53 = vld [vmem:[#allocation5 + $0x38] sm:$0xff]
    %v54 = vld [vmem:[#allocation5 + $0x40] sm:$0xff]
    %v55 = vld [vmem:[#allocation5 + $0x48] sm:$0xff]
    %v56 = vld [vmem:[#allocation5 + $0x50] sm:$0xff]
    %v57 = vld [vmem:[#allocation5 + $0x58] sm:$0xff]
    %v58 = vld [vmem:[%s2] sm:$0x1]
    %v60 = vperm.slane %v58, 0
    %vm62 = vcmask 785408
    %v64 = vsel %vm62, %v45, 0
    %66 = vmatpush.msra.mxu0 0.0
    %67 = vmatpush.msra.mxu0 0.0
    %68 = vmatpush.msra.mxu0 0.0
    %69 = vmatpush.msra.mxu0 0.0
    %70 = vmatpush.msra.mxu0 %v57
    %71 = vmatpush.msra.mxu0 %v56
    %72 = vmatpush.msra.mxu0 %v55
    %73 = vmatpush.msra.mxu0 %v54
    %74 = vmatpush.msra.mxu0 %v53
    %75 = vmatpush.msra.mxu0 %v52
    %76 = vmatpush.msra.mxu0 %v51
    %77 = vmatpush.msra.mxu0 %v50
    %78 = vmatpush.msra.mxu0 %v49
    %79 = vmatpush.msra.mxu0 %v48
    %80 = vmatpush.msra.mxu0 %v47
    %81 = vmatpush.msra.mxu0 %v46
    %82 = vmatmul.f32.gmra.mxu0 %v64
    %v83 = vpop.f32.mrf.mxu0
    %v84 = vadd.f32 %v60, %v83
    %85 = vdwg.mxu0
    %86 = vst [vmem:[#allocation7] sm:$0xff] %v84
    // Predicated region
    $region22: #{tpu_custom_call.1} parent=1 // pred_check
      _
    $region23: #{tpu_custom_call.1} parent=1 // pred_check_branch
      %88 = sbr.rel (0) target = $region25
    $region24: #{tpu_custom_call.1} parent=1 // pred_region
      %90 = vsyncadd [#allocation4], 0
      %s92 = sshll.u32 [#allocation7], 4
      %s93 = int_to_ptr.vmem [resolvable:$true] %s92
      %s94 = sshll.u32 %s3, 4
      %s95 = int_to_ptr.hbm [resolvable:$true] %s94
      %97 = dma.vmem_to_hbm [thread:$0]  %s93, 128, %s95, [#allocation4]
    $region25: #{tpu_custom_call.1} parent=1 // pred_fallthru
      _
    // Predicated region
    $region26: #{tpu_custom_call.1} parent=1 // pred_check
      _
    $region27: #{tpu_custom_call.1} parent=1 // pred_check_branch
      %99 = sbr.rel (0) target = $region29
    $region28: #{tpu_custom_call.1} parent=1 // pred_region
      %101 = dma.done [#allocation4], 128
    $region29: #{tpu_custom_call.1} parent=1 // pred_fallthru
      _
    %102 = vsyncpa [#allocation3], 1
    %103 = vsyncpa [#allocation6], 1
    %104 = vsyncpa [#allocation4], 1

</llo_original>
